<compile_context>
chip_gen: v5e
topology: v5e:2x2
jax: 0.10.0
libtpu: 0.0.40
codegen_flags: <defaults>
</compile_context>

<pallas_src>
import math

import jax
import jax.numpy as jnp
from jax.experimental import pallas as pl
from jax.experimental.pallas import tpu as pltpu

# ---- small, TPU-friendly problem sizes consistent with the module ----
B = 2            # batch (number of texts)
S = 16           # sequence length (words per text)
D = 128          # word_embedding_dim
H = 4            # num_attention_heads
DK = D // H      # per-head dim
QDIM = 32        # query_vector_dim (additive attention)
VOCAB = 100      # vocabulary size for the synthetic embedding table
SCALE = 1.0 / math.sqrt(DK)

TB = 2           # texts per grid step (== B at this size; batch-tile for scaling / megacore)


def text_encoder_kernel(x_ref, wqkv_ref, bqkv_ref, wa_ref, ba_ref, qv_ref,
                        out_ref, ctx_ref):
    """One grid step processes TB texts.

    x_ref    : (TB*S, D)  bf16  word embeddings, batch folded into sublanes
    wqkv_ref : (D, 3D)    bf16  fused [Wq | Wk | Wv]
    bqkv_ref : (1, 3D)    f32   fused [bq | bk | bv]
    wa_ref   : (D, QDIM)  bf16  additive-attention linear
    ba_ref   : (1, QDIM)  f32
    qv_ref   : (1, QDIM)  bf16  additive-attention query vector
    out_ref  : (TB, D)    f32   final text vectors
    ctx_ref  : (TB*S, D)  f32   VMEM scratch holding the concatenated-head context slab
    """
    # ---- fused Q/K/V projection: one lane-dense MXU matmul, f32 accumulate ----
    qkv = jnp.dot(x_ref[...], wqkv_ref[...],
                  preferred_element_type=jnp.float32) + bqkv_ref[...]     # (TB*S, 3D) f32
    qkv_bf = qkv.astype(jnp.bfloat16)

    # ---- scores for every (b, h), stacked along sublanes; softmax done once ----
    score_tiles = []
    for b in range(TB):                                   # static loop, TB = 2
        r0 = b * S
        for h in range(H):                                # static loop, H = 4
            c0 = h * DK
            qs = qkv_bf[r0:r0 + S, c0:c0 + DK]            # (S, DK)
            ks = qkv_bf[r0:r0 + S, D + c0:D + c0 + DK]    # (S, DK)
            # q @ k^T (contract last dims, no explicit transpose)
            score_tiles.append(
                jax.lax.dot_general(qs, ks, (((1,), (1,)), ((), ())),
                                    preferred_element_type=jnp.float32))  # (S, S) f32
    scores = jnp.concatenate(score_tiles, axis=0) * SCALE                 # (TB*H*S, S) f32
    scores = scores - jnp.max(scores, axis=-1, keepdims=True)
    e = jnp.exp(scores)
    probs = e * pl.reciprocal(jnp.sum(e, axis=-1, keepdims=True), approx=True)
    probs_bf = probs.astype(jnp.bfloat16)                                 # (TB*H*S, S)

    # ---- PV matmuls; write each head's result into the ctx slab at its lane offset ----
    for b in range(TB):
        r0 = b * S
        for h in range(H):
            c0 = h * DK
            p_bh = probs_bf[(b * H + h) * S:(b * H + h + 1) * S, :]       # (S, S)
            vs = qkv_bf[r0:r0 + S, 2 * D + c0:2 * D + c0 + DK]            # (S, DK)
            ctx_ref[r0:r0 + S, c0:c0 + DK] = jnp.dot(
                p_bh, vs, preferred_element_type=jnp.float32)             # (S, DK) f32

    ctx_bf = ctx_ref[...].astype(jnp.bfloat16)                            # (TB*S, D)

    # ---- additive attention fused across the batch ----
    t = jnp.tanh(jnp.dot(ctx_bf, wa_ref[...],
                         preferred_element_type=jnp.float32) + ba_ref[...])  # (TB*S, QDIM) f32
    att = jax.lax.dot_general(qv_ref[...], t.astype(jnp.bfloat16),
                              (((1,), (1,)), ((), ())),
                              preferred_element_type=jnp.float32)         # (1, TB*S) lane-dense

    # per-text softmax over the sequence + weighted sum (rows written directly)
    for b in range(TB):
        a_b = att[:, b * S:(b + 1) * S]                                   # (1, S)
        a_b = a_b - jnp.max(a_b, axis=-1, keepdims=True)
        e_b = jnp.exp(a_b)
        w_b = e_b * pl.reciprocal(jnp.sum(e_b, axis=-1, keepdims=True), approx=True)
        out_ref[b:b + 1, :] = jnp.dot(
            w_b.astype(jnp.bfloat16), ctx_bf[b * S:(b + 1) * S, :],
            preferred_element_type=jnp.float32).astype(out_ref.dtype)     # (1, D)


def prepare_params(embedding_table, wq, wk, wv, bq, bk, bv, wa, ba, qv):
    """One-time parameter prep (module init): weight fusion + bf16 casts, hoisted off the call path."""
    table_bf = embedding_table.astype(jnp.bfloat16)                       # (VOCAB, D)
    wqkv = jnp.concatenate([wq, wk, wv], axis=1).astype(jnp.bfloat16)     # (D, 3D)
    bqkv = jnp.concatenate([bq, bk, bv], axis=1)                          # (1, 3D) f32
    wa_bf = wa.astype(jnp.bfloat16)                                       # (D, QDIM)
    qv_bf = qv.astype(jnp.bfloat16)                                       # (1, QDIM)
    return table_bf, wqkv, bqkv, wa_bf, ba, qv_bf


def text_encoder_pallas(emb_bf, wqkv, bqkv, wa_bf, ba, qv_bf):
    """emb_bf: (B, S, D) bfloat16 word embeddings. Returns (B, D) float32."""
    x2d = emb_bf.reshape(B * S, D)
    grid = (pl.cdiv(B, TB),)
    return pl.pallas_call(
        text_encoder_kernel,
        out_shape=jax.ShapeDtypeStruct((B, D), jnp.float32),
        grid_spec=pltpu.PrefetchScalarGridSpec(
            num_scalar_prefetch=0,
            grid=grid,
            in_specs=[
                pl.BlockSpec((TB * S, D), lambda i: (i, 0)),      # activations: batch-tiled
                pl.BlockSpec((D, 3 * D), lambda i: (0, 0)),       # fused Wqkv (resident)
                pl.BlockSpec((1, 3 * D), lambda i: (0, 0)),
                pl.BlockSpec((D, QDIM), lambda i: (0, 0)),
                pl.BlockSpec((1, QDIM), lambda i: (0, 0)),
                pl.BlockSpec((1, QDIM), lambda i: (0, 0)),
            ],
            out_specs=pl.BlockSpec((TB, D), lambda i: (i, 0)),
            scratch_shapes=[pltpu.VMEM((TB * S, D), jnp.float32)],        # ctx slab
        ),
        compiler_params=pltpu.CompilerParams(
            dimension_semantics=("parallel",),                            # megacore-shardable
            vmem_limit_bytes=32 * 1024 * 1024,
        ),
    )(x2d, wqkv, bqkv, wa_bf, ba, qv_bf)


def text_encoder_reference(emb, wq, wk, wv, bq, bk, bv, wa, ba, qv):
    """Pure-JAX f32 reference mirroring the PyTorch forward (eval mode)."""
    q = emb @ wq + bq
    k = emb @ wk + bk
    v = emb @ wv + bv
    qh = q.reshape(B, S, H, DK)
    kh = k.reshape(B, S, H, DK)
    vh = v.reshape(B, S, H, DK)
    scores = jnp.einsum('bqhd,bkhd->bhqk', qh, kh) * SCALE
    probs = jax.nn.softmax(scores, axis=-1)
    ctx = jnp.einsum('bhqk,bkhd->bqhd', probs, vh).reshape(B, S, D)
    t = jnp.tanh(ctx @ wa + ba)                       # (B, S, QDIM)
    att = jnp.einsum('bsq,q->bs', t, qv[0])           # (B, S)
    w = jax.nn.softmax(att, axis=1)                   # softmax over seq
    return jnp.einsum('bs,bsd->bd', w, ctx)           # (B, D)


if __name__ == "__main__":
    key = jax.random.PRNGKey(0)
    keys = jax.random.split(key, 12)

    # Deterministic synthetic parameters (shapes implied by the module __init__).
    embedding_table = jax.random.normal(keys[0], (VOCAB, D), jnp.float32) * 0.1
    wq = jax.random.normal(keys[1], (D, D), jnp.float32) * 0.05
    wk = jax.random.normal(keys[2], (D, D), jnp.float32) * 0.05
    wv = jax.random.normal(keys[3], (D, D), jnp.float32) * 0.05
    bq = jax.random.normal(keys[4], (1, D), jnp.float32) * 0.01
    bk = jax.random.normal(keys[5], (1, D), jnp.float32) * 0.01
    bv = jax.random.normal(keys[6], (1, D), jnp.float32) * 0.01
    wa = jax.random.normal(keys[7], (D, QDIM), jnp.float32) * 0.05
    ba = jax.random.normal(keys[8], (1, QDIM), jnp.float32) * 0.01
    qv = jax.random.uniform(keys[9], (1, QDIM), jnp.float32, -0.1, 0.1)

    # One-time parameter prep (fusion + casts), off the per-call path.
    table_bf, wqkv, bqkv, wa_bf, ba_f32, qv_bf = jax.block_until_ready(
        prepare_params(embedding_table, wq, wk, wv, bq, bk, bv, wa, ba, qv))

    # Input: token ids (B, S); embedding lookup is glue (plain JAX gather, bf16 table).
    text = jax.random.randint(keys[10], (B, S), 0, VOCAB, jnp.int32)
    emb_bf = jnp.take(table_bf, text, axis=0)                # (B, S, D) bf16

    out = text_encoder_pallas(emb_bf, wqkv, bqkv, wa_bf, ba_f32, qv_bf)
    out = jax.block_until_ready(out)

    # Reference computed in f32 from the same (bf16-stored) embeddings, original f32 weights.
    emb_f32 = emb_bf.astype(jnp.float32)
    ref = text_encoder_reference(emb_f32, wq, wk, wv, bq, bk, bv, wa, ba, qv)

    assert out.shape == (B, D)
    # bf16 MXU inputs (f32 accumulation) + approx reciprocals -> loosened tolerance.
    assert jnp.allclose(out, ref, atol=3e-3, rtol=3e-2), "mismatch vs reference"

    print("KERNEL_OK")
</pallas_src>

<mosaic_0001>
module attributes {stable_mosaic.version = 11 : i64} {
  func.func @text_encoder_kernel(%arg0: i32, %arg1: memref<32x128xbf16, #tpu.memory_space<vmem>>, %arg2: memref<128x384xbf16, #tpu.memory_space<vmem>>, %arg3: memref<1x384xf32, #tpu.memory_space<vmem>>, %arg4: memref<128x32xbf16, #tpu.memory_space<vmem>>, %arg5: memref<1x32xf32, #tpu.memory_space<vmem>>, %arg6: memref<1x32xbf16, #tpu.memory_space<vmem>>, %arg7: memref<2x128xf32, #tpu.memory_space<vmem>>, %arg8: memref<32x128xf32, #tpu.memory_space<vmem>>) attributes {dimension_semantics = [#tpu.dimension_semantics<parallel>], iteration_bounds = array<i64: 1>, scalar_prefetch = 0 : i64, scratch_operands = 1 : i64, tpu.core_type = #tpu.core_type<tc>, window_params = [{transform_indices = @transform_0, window_bounds = array<i64: 32, 128>}, {pipeline_mode = #tpu.pipeline_mode<synchronous>, transform_indices = @transform_1, window_bounds = array<i64: 128, 384>}, {pipeline_mode = #tpu.pipeline_mode<synchronous>, transform_indices = @transform_2, window_bounds = array<i64: 1, 384>}, {pipeline_mode = #tpu.pipeline_mode<synchronous>, transform_indices = @transform_3, window_bounds = array<i64: 128, 32>}, {pipeline_mode = #tpu.pipeline_mode<synchronous>, transform_indices = @transform_4, window_bounds = array<i64: 1, 32>}, {pipeline_mode = #tpu.pipeline_mode<synchronous>, transform_indices = @transform_5, window_bounds = array<i64: 1, 32>}, {transform_indices = @transform_6, window_bounds = array<i64: 2, 128>}]} {
    %c0 = arith.constant 0 : index
    %c0_0 = arith.constant 0 : index
    %0 = vector.load %arg1[%c0, %c0_0] : memref<32x128xbf16, #tpu.memory_space<vmem>>, vector<32x128xbf16>
    %c0_1 = arith.constant 0 : index
    %c0_2 = arith.constant 0 : index
    %1 = vector.load %arg2[%c0_1, %c0_2] : memref<128x384xbf16, #tpu.memory_space<vmem>>, vector<128x384xbf16>
    %cst = arith.constant dense<0.000000e+00> : vector<32x384xf32>
    %2 = tpu.matmul %0, %1, %cst {dimension_numbers = #tpu.dot_dimension_numbers<[1], [0], [0], [1], [0, 0, 1, 1], [], []>} : vector<32x128xbf16>, vector<128x384xbf16>, vector<32x384xf32> -> vector<32x384xf32>
    %c0_3 = arith.constant 0 : index
    %c0_4 = arith.constant 0 : index
    %3 = vector.load %arg3[%c0_3, %c0_4] : memref<1x384xf32, #tpu.memory_space<vmem>>, vector<1x384xf32>
    %4 = vector.broadcast %3 : vector<1x384xf32> to vector<32x384xf32>
    %5 = arith.addf %2, %4 : vector<32x384xf32>
    %6 = arith.truncf %5 : vector<32x384xf32> to vector<32x384xbf16>
    %7 = vector.extract_strided_slice %6 {offsets = [0, 0], sizes = [16, 32], strides = [1, 1]} : vector<32x384xbf16> to vector<16x32xbf16>
    %8 = vector.extract_strided_slice %6 {offsets = [0, 128], sizes = [16, 32], strides = [1, 1]} : vector<32x384xbf16> to vector<16x32xbf16>
    %cst_5 = arith.constant dense<0.000000e+00> : vector<16x16xf32>
    %9 = tpu.matmul %7, %8, %cst_5 {dimension_numbers = #tpu.dot_dimension_numbers<[1], [1], [0], [0], [0, 0, 1, 0], [], []>} : vector<16x32xbf16>, vector<16x32xbf16>, vector<16x16xf32> -> vector<16x16xf32>
    %10 = vector.extract_strided_slice %6 {offsets = [0, 32], sizes = [16, 32], strides = [1, 1]} : vector<32x384xbf16> to vector<16x32xbf16>
    %11 = vector.extract_strided_slice %6 {offsets = [0, 160], sizes = [16, 32], strides = [1, 1]} : vector<32x384xbf16> to vector<16x32xbf16>
    %cst_6 = arith.constant dense<0.000000e+00> : vector<16x16xf32>
    %12 = tpu.matmul %10, %11, %cst_6 {dimension_numbers = #tpu.dot_dimension_numbers<[1], [1], [0], [0], [0, 0, 1, 0], [], []>} : vector<16x32xbf16>, vector<16x32xbf16>, vector<16x16xf32> -> vector<16x16xf32>
    %13 = vector.extract_strided_slice %6 {offsets = [0, 64], sizes = [16, 32], strides = [1, 1]} : vector<32x384xbf16> to vector<16x32xbf16>
    %14 = vector.extract_strided_slice %6 {offsets = [0, 192], sizes = [16, 32], strides = [1, 1]} : vector<32x384xbf16> to vector<16x32xbf16>
    %cst_7 = arith.constant dense<0.000000e+00> : vector<16x16xf32>
    %15 = tpu.matmul %13, %14, %cst_7 {dimension_numbers = #tpu.dot_dimension_numbers<[1], [1], [0], [0], [0, 0, 1, 0], [], []>} : vector<16x32xbf16>, vector<16x32xbf16>, vector<16x16xf32> -> vector<16x16xf32>
    %16 = vector.extract_strided_slice %6 {offsets = [0, 96], sizes = [16, 32], strides = [1, 1]} : vector<32x384xbf16> to vector<16x32xbf16>
    %17 = vector.extract_strided_slice %6 {offsets = [0, 224], sizes = [16, 32], strides = [1, 1]} : vector<32x384xbf16> to vector<16x32xbf16>
    %cst_8 = arith.constant dense<0.000000e+00> : vector<16x16xf32>
    %18 = tpu.matmul %16, %17, %cst_8 {dimension_numbers = #tpu.dot_dimension_numbers<[1], [1], [0], [0], [0, 0, 1, 0], [], []>} : vector<16x32xbf16>, vector<16x32xbf16>, vector<16x16xf32> -> vector<16x16xf32>
    %19 = vector.extract_strided_slice %6 {offsets = [16, 0], sizes = [16, 32], strides = [1, 1]} : vector<32x384xbf16> to vector<16x32xbf16>
    %20 = vector.extract_strided_slice %6 {offsets = [16, 128], sizes = [16, 32], strides = [1, 1]} : vector<32x384xbf16> to vector<16x32xbf16>
    %cst_9 = arith.constant dense<0.000000e+00> : vector<16x16xf32>
    %21 = tpu.matmul %19, %20, %cst_9 {dimension_numbers = #tpu.dot_dimension_numbers<[1], [1], [0], [0], [0, 0, 1, 0], [], []>} : vector<16x32xbf16>, vector<16x32xbf16>, vector<16x16xf32> -> vector<16x16xf32>
    %22 = vector.extract_strided_slice %6 {offsets = [16, 32], sizes = [16, 32], strides = [1, 1]} : vector<32x384xbf16> to vector<16x32xbf16>
    %23 = vector.extract_strided_slice %6 {offsets = [16, 160], sizes = [16, 32], strides = [1, 1]} : vector<32x384xbf16> to vector<16x32xbf16>
    %cst_10 = arith.constant dense<0.000000e+00> : vector<16x16xf32>
    %24 = tpu.matmul %22, %23, %cst_10 {dimension_numbers = #tpu.dot_dimension_numbers<[1], [1], [0], [0], [0, 0, 1, 0], [], []>} : vector<16x32xbf16>, vector<16x32xbf16>, vector<16x16xf32> -> vector<16x16xf32>
    %25 = vector.extract_strided_slice %6 {offsets = [16, 64], sizes = [16, 32], strides = [1, 1]} : vector<32x384xbf16> to vector<16x32xbf16>
    %26 = vector.extract_strided_slice %6 {offsets = [16, 192], sizes = [16, 32], strides = [1, 1]} : vector<32x384xbf16> to vector<16x32xbf16>
    %cst_11 = arith.constant dense<0.000000e+00> : vector<16x16xf32>
    %27 = tpu.matmul %25, %26, %cst_11 {dimension_numbers = #tpu.dot_dimension_numbers<[1], [1], [0], [0], [0, 0, 1, 0], [], []>} : vector<16x32xbf16>, vector<16x32xbf16>, vector<16x16xf32> -> vector<16x16xf32>
    %28 = vector.extract_strided_slice %6 {offsets = [16, 96], sizes = [16, 32], strides = [1, 1]} : vector<32x384xbf16> to vector<16x32xbf16>
    %29 = vector.extract_strided_slice %6 {offsets = [16, 224], sizes = [16, 32], strides = [1, 1]} : vector<32x384xbf16> to vector<16x32xbf16>
    %cst_12 = arith.constant dense<0.000000e+00> : vector<16x16xf32>
    %30 = tpu.matmul %28, %29, %cst_12 {dimension_numbers = #tpu.dot_dimension_numbers<[1], [1], [0], [0], [0, 0, 1, 0], [], []>} : vector<16x32xbf16>, vector<16x32xbf16>, vector<16x16xf32> -> vector<16x16xf32>
    %31 = tpu.concatenate %9, %12, %15, %18, %21, %24, %27, %30 in 0 : vector<16x16xf32>, vector<16x16xf32>, vector<16x16xf32>, vector<16x16xf32>, vector<16x16xf32>, vector<16x16xf32>, vector<16x16xf32>, vector<16x16xf32> -> vector<128x16xf32>
    %cst_13 = arith.constant 0.176776692 : f32
    %32 = vector.broadcast %cst_13 : f32 to vector<128x16xf32>
    %33 = arith.mulf %31, %32 : vector<128x16xf32>
    %cst_14 = arith.constant dense<0xFF800000> : vector<128xf32>
    %34 = vector.multi_reduction <maximumf>, %33, %cst_14 [1] : vector<128x16xf32> to vector<128xf32>
    %35 = vector.shape_cast %34 : vector<128xf32> to vector<128x1xf32>
    %36 = vector.broadcast %35 : vector<128x1xf32> to vector<128x16xf32>
    %37 = arith.subf %33, %36 : vector<128x16xf32>
    %38 = math.exp %37 : vector<128x16xf32>
    %cst_15 = arith.constant dense<0.000000e+00> : vector<128xf32>
    %39 = vector.multi_reduction <add>, %38, %cst_15 [1] : vector<128x16xf32> to vector<128xf32>
    %40 = vector.shape_cast %39 : vector<128xf32> to vector<128x1xf32>
    %41 = tpu.reciprocal %40 {approx = true} : vector<128x1xf32> -> vector<128x1xf32>
    %42 = vector.broadcast %41 : vector<128x1xf32> to vector<128x16xf32>
    %43 = arith.mulf %38, %42 : vector<128x16xf32>
    %44 = arith.truncf %43 : vector<128x16xf32> to vector<128x16xbf16>
    %45 = vector.extract_strided_slice %44 {offsets = [0, 0], sizes = [16, 16], strides = [1, 1]} : vector<128x16xbf16> to vector<16x16xbf16>
    %46 = vector.extract_strided_slice %6 {offsets = [0, 256], sizes = [16, 32], strides = [1, 1]} : vector<32x384xbf16> to vector<16x32xbf16>
    %cst_16 = arith.constant dense<0.000000e+00> : vector<16x32xf32>
    %47 = tpu.matmul %45, %46, %cst_16 {dimension_numbers = #tpu.dot_dimension_numbers<[1], [0], [0], [1], [0, 0, 1, 1], [], []>} : vector<16x16xbf16>, vector<16x32xbf16>, vector<16x32xf32> -> vector<16x32xf32>
    %c0_17 = arith.constant 0 : index
    %c0_18 = arith.constant 0 : index
    %48 = vector.load %arg8[%c0_17, %c0_18] : memref<32x128xf32, #tpu.memory_space<vmem>>, vector<16x32xf32>
    tpu.vector_store %arg8[%c0_17, %c0_18], %47 {strides = array<i32>} : memref<32x128xf32, #tpu.memory_space<vmem>>, vector<16x32xf32>,
    %49 = vector.extract_strided_slice %44 {offsets = [16, 0], sizes = [16, 16], strides = [1, 1]} : vector<128x16xbf16> to vector<16x16xbf16>
    %50 = vector.extract_strided_slice %6 {offsets = [0, 288], sizes = [16, 32], strides = [1, 1]} : vector<32x384xbf16> to vector<16x32xbf16>
    %cst_19 = arith.constant dense<0.000000e+00> : vector<16x32xf32>
    %51 = tpu.matmul %49, %50, %cst_19 {dimension_numbers = #tpu.dot_dimension_numbers<[1], [0], [0], [1], [0, 0, 1, 1], [], []>} : vector<16x16xbf16>, vector<16x32xbf16>, vector<16x32xf32> -> vector<16x32xf32>
    %c0_20 = arith.constant 0 : index
    %c32 = arith.constant 32 : index
    %52 = vector.load %arg8[%c0_20, %c32] : memref<32x128xf32, #tpu.memory_space<vmem>>, vector<16x32xf32>
    tpu.vector_store %arg8[%c0_20, %c32], %51 {strides = array<i32>} : memref<32x128xf32, #tpu.memory_space<vmem>>, vector<16x32xf32>,
    %53 = vector.extract_strided_slice %44 {offsets = [32, 0], sizes = [16, 16], strides = [1, 1]} : vector<128x16xbf16> to vector<16x16xbf16>
    %54 = vector.extract_strided_slice %6 {offsets = [0, 320], sizes = [16, 32], strides = [1, 1]} : vector<32x384xbf16> to vector<16x32xbf16>
    %cst_21 = arith.constant dense<0.000000e+00> : vector<16x32xf32>
    %55 = tpu.matmul %53, %54, %cst_21 {dimension_numbers = #tpu.dot_dimension_numbers<[1], [0], [0], [1], [0, 0, 1, 1], [], []>} : vector<16x16xbf16>, vector<16x32xbf16>, vector<16x32xf32> -> vector<16x32xf32>
    %c0_22 = arith.constant 0 : index
    %c64 = arith.constant 64 : index
    %56 = vector.load %arg8[%c0_22, %c64] : memref<32x128xf32, #tpu.memory_space<vmem>>, vector<16x32xf32>
    tpu.vector_store %arg8[%c0_22, %c64], %55 {strides = array<i32>} : memref<32x128xf32, #tpu.memory_space<vmem>>, vector<16x32xf32>,
    %57 = vector.extract_strided_slice %44 {offsets = [48, 0], sizes = [16, 16], strides = [1, 1]} : vector<128x16xbf16> to vector<16x16xbf16>
    %58 = vector.extract_strided_slice %6 {offsets = [0, 352], sizes = [16, 32], strides = [1, 1]} : vector<32x384xbf16> to vector<16x32xbf16>
    %cst_23 = arith.constant dense<0.000000e+00> : vector<16x32xf32>
    %59 = tpu.matmul %57, %58, %cst_23 {dimension_numbers = #tpu.dot_dimension_numbers<[1], [0], [0], [1], [0, 0, 1, 1], [], []>} : vector<16x16xbf16>, vector<16x32xbf16>, vector<16x32xf32> -> vector<16x32xf32>
    %c0_24 = arith.constant 0 : index
    %c96 = arith.constant 96 : index
    %60 = vector.load %arg8[%c0_24, %c96] : memref<32x128xf32, #tpu.memory_space<vmem>>, vector<16x32xf32>
    tpu.vector_store %arg8[%c0_24, %c96], %59 {strides = array<i32>} : memref<32x128xf32, #tpu.memory_space<vmem>>, vector<16x32xf32>,
    %61 = vector.extract_strided_slice %44 {offsets = [64, 0], sizes = [16, 16], strides = [1, 1]} : vector<128x16xbf16> to vector<16x16xbf16>
    %62 = vector.extract_strided_slice %6 {offsets = [16, 256], sizes = [16, 32], strides = [1, 1]} : vector<32x384xbf16> to vector<16x32xbf16>
    %cst_25 = arith.constant dense<0.000000e+00> : vector<16x32xf32>
    %63 = tpu.matmul %61, %62, %cst_25 {dimension_numbers = #tpu.dot_dimension_numbers<[1], [0], [0], [1], [0, 0, 1, 1], [], []>} : vector<16x16xbf16>, vector<16x32xbf16>, vector<16x32xf32> -> vector<16x32xf32>
    %c16 = arith.constant 16 : index
    %c0_26 = arith.constant 0 : index
    %64 = vector.load %arg8[%c16, %c0_26] : memref<32x128xf32, #tpu.memory_space<vmem>>, vector<16x32xf32>
    tpu.vector_store %arg8[%c16, %c0_26], %63 {strides = array<i32>} : memref<32x128xf32, #tpu.memory_space<vmem>>, vector<16x32xf32>,
    %65 = vector.extract_strided_slice %44 {offsets = [80, 0], sizes = [16, 16], strides = [1, 1]} : vector<128x16xbf16> to vector<16x16xbf16>
    %66 = vector.extract_strided_slice %6 {offsets = [16, 288], sizes = [16, 32], strides = [1, 1]} : vector<32x384xbf16> to vector<16x32xbf16>
    %cst_27 = arith.constant dense<0.000000e+00> : vector<16x32xf32>
    %67 = tpu.matmul %65, %66, %cst_27 {dimension_numbers = #tpu.dot_dimension_numbers<[1], [0], [0], [1], [0, 0, 1, 1], [], []>} : vector<16x16xbf16>, vector<16x32xbf16>, vector<16x32xf32> -> vector<16x32xf32>
    %c16_28 = arith.constant 16 : index
    %c32_29 = arith.constant 32 : index
    %68 = vector.load %arg8[%c16_28, %c32_29] : memref<32x128xf32, #tpu.memory_space<vmem>>, vector<16x32xf32>
    tpu.vector_store %arg8[%c16_28, %c32_29], %67 {strides = array<i32>} : memref<32x128xf32, #tpu.memory_space<vmem>>, vector<16x32xf32>,
    %69 = vector.extract_strided_slice %44 {offsets = [96, 0], sizes = [16, 16], strides = [1, 1]} : vector<128x16xbf16> to vector<16x16xbf16>
    %70 = vector.extract_strided_slice %6 {offsets = [16, 320], sizes = [16, 32], strides = [1, 1]} : vector<32x384xbf16> to vector<16x32xbf16>
    %cst_30 = arith.constant dense<0.000000e+00> : vector<16x32xf32>
    %71 = tpu.matmul %69, %70, %cst_30 {dimension_numbers = #tpu.dot_dimension_numbers<[1], [0], [0], [1], [0, 0, 1, 1], [], []>} : vector<16x16xbf16>, vector<16x32xbf16>, vector<16x32xf32> -> vector<16x32xf32>
    %c16_31 = arith.constant 16 : index
    %c64_32 = arith.constant 64 : index
    %72 = vector.load %arg8[%c16_31, %c64_32] : memref<32x128xf32, #tpu.memory_space<vmem>>, vector<16x32xf32>
    tpu.vector_store %arg8[%c16_31, %c64_32], %71 {strides = array<i32>} : memref<32x128xf32, #tpu.memory_space<vmem>>, vector<16x32xf32>,
    %73 = vector.extract_strided_slice %44 {offsets = [112, 0], sizes = [16, 16], strides = [1, 1]} : vector<128x16xbf16> to vector<16x16xbf16>
    %74 = vector.extract_strided_slice %6 {offsets = [16, 352], sizes = [16, 32], strides = [1, 1]} : vector<32x384xbf16> to vector<16x32xbf16>
    %cst_33 = arith.constant dense<0.000000e+00> : vector<16x32xf32>
    %75 = tpu.matmul %73, %74, %cst_33 {dimension_numbers = #tpu.dot_dimension_numbers<[1], [0], [0], [1], [0, 0, 1, 1], [], []>} : vector<16x16xbf16>, vector<16x32xbf16>, vector<16x32xf32> -> vector<16x32xf32>
    %c16_34 = arith.constant 16 : index
    %c96_35 = arith.constant 96 : index
    %76 = vector.load %arg8[%c16_34, %c96_35] : memref<32x128xf32, #tpu.memory_space<vmem>>, vector<16x32xf32>
    tpu.vector_store %arg8[%c16_34, %c96_35], %75 {strides = array<i32>} : memref<32x128xf32, #tpu.memory_space<vmem>>, vector<16x32xf32>,
    %c0_36 = arith.constant 0 : index
    %c0_37 = arith.constant 0 : index
    %77 = vector.load %arg8[%c0_36, %c0_37] : memref<32x128xf32, #tpu.memory_space<vmem>>, vector<32x128xf32>
    %78 = arith.truncf %77 : vector<32x128xf32> to vector<32x128xbf16>
    %c0_38 = arith.constant 0 : index
    %c0_39 = arith.constant 0 : index
    %79 = vector.load %arg4[%c0_38, %c0_39] : memref<128x32xbf16, #tpu.memory_space<vmem>>, vector<128x32xbf16>
    %cst_40 = arith.constant dense<0.000000e+00> : vector<32x32xf32>
    %80 = tpu.matmul %78, %79, %cst_40 {dimension_numbers = #tpu.dot_dimension_numbers<[1], [0], [0], [1], [0, 0, 1, 1], [], []>} : vector<32x128xbf16>, vector<128x32xbf16>, vector<32x32xf32> -> vector<32x32xf32>
    %c0_41 = arith.constant 0 : index
    %c0_42 = arith.constant 0 : index
    %81 = vector.load %arg5[%c0_41, %c0_42] : memref<1x32xf32, #tpu.memory_space<vmem>>, vector<1x32xf32>
    %82 = vector.broadcast %81 : vector<1x32xf32> to vector<32x32xf32>
    %83 = arith.addf %80, %82 : vector<32x32xf32>
    %84 = math.tanh %83 : vector<32x32xf32>
    %c0_43 = arith.constant 0 : index
    %c0_44 = arith.constant 0 : index
    %85 = vector.load %arg6[%c0_43, %c0_44] : memref<1x32xbf16, #tpu.memory_space<vmem>>, vector<1x32xbf16>
    %86 = arith.truncf %84 : vector<32x32xf32> to vector<32x32xbf16>
    %cst_45 = arith.constant dense<0.000000e+00> : vector<1x32xf32>
    %87 = tpu.matmul %85, %86, %cst_45 {dimension_numbers = #tpu.dot_dimension_numbers<[1], [1], [0], [0], [0, 0, 1, 0], [], []>} : vector<1x32xbf16>, vector<32x32xbf16>, vector<1x32xf32> -> vector<1x32xf32>
    %88 = vector.extract_strided_slice %87 {offsets = [0, 0], sizes = [1, 16], strides = [1, 1]} : vector<1x32xf32> to vector<1x16xf32>
    %cst_46 = arith.constant dense<0xFF800000> : vector<1xf32>
    %89 = vector.multi_reduction <maximumf>, %88, %cst_46 [1] : vector<1x16xf32> to vector<1xf32>
    %90 = vector.shape_cast %89 : vector<1xf32> to vector<1x1xf32>
    %91 = vector.broadcast %90 : vector<1x1xf32> to vector<1x16xf32>
    %92 = arith.subf %88, %91 : vector<1x16xf32>
    %93 = math.exp %92 : vector<1x16xf32>
    %cst_47 = arith.constant dense<0.000000e+00> : vector<1xf32>
    %94 = vector.multi_reduction <add>, %93, %cst_47 [1] : vector<1x16xf32> to vector<1xf32>
    %95 = vector.shape_cast %94 : vector<1xf32> to vector<1x1xf32>
    %96 = tpu.reciprocal %95 {approx = true} : vector<1x1xf32> -> vector<1x1xf32>
    %97 = vector.broadcast %96 : vector<1x1xf32> to vector<1x16xf32>
    %98 = arith.mulf %93, %97 : vector<1x16xf32>
    %99 = arith.truncf %98 : vector<1x16xf32> to vector<1x16xbf16>
    %100 = vector.extract_strided_slice %78 {offsets = [0, 0], sizes = [16, 128], strides = [1, 1]} : vector<32x128xbf16> to vector<16x128xbf16>
    %cst_48 = arith.constant dense<0.000000e+00> : vector<1x128xf32>
    %101 = tpu.matmul %99, %100, %cst_48 {dimension_numbers = #tpu.dot_dimension_numbers<[1], [0], [0], [1], [0, 0, 1, 1], [], []>} : vector<1x16xbf16>, vector<16x128xbf16>, vector<1x128xf32> -> vector<1x128xf32>
    %c0_49 = arith.constant 0 : index
    %c0_50 = arith.constant 0 : index
    %102 = vector.load %arg7[%c0_49, %c0_50] : memref<2x128xf32, #tpu.memory_space<vmem>>, vector<1x128xf32>
    tpu.vector_store %arg7[%c0_49, %c0_50], %101 {strides = array<i32>} : memref<2x128xf32, #tpu.memory_space<vmem>>, vector<1x128xf32>,
    %103 = vector.extract_strided_slice %87 {offsets = [0, 16], sizes = [1, 16], strides = [1, 1]} : vector<1x32xf32> to vector<1x16xf32>
    %cst_51 = arith.constant dense<0xFF800000> : vector<1xf32>
    %104 = vector.multi_reduction <maximumf>, %103, %cst_51 [1] : vector<1x16xf32> to vector<1xf32>
    %105 = vector.shape_cast %104 : vector<1xf32> to vector<1x1xf32>
    %106 = vector.broadcast %105 : vector<1x1xf32> to vector<1x16xf32>
    %107 = arith.subf %103, %106 : vector<1x16xf32>
    %108 = math.exp %107 : vector<1x16xf32>
    %cst_52 = arith.constant dense<0.000000e+00> : vector<1xf32>
    %109 = vector.multi_reduction <add>, %108, %cst_52 [1] : vector<1x16xf32> to vector<1xf32>
    %110 = vector.shape_cast %109 : vector<1xf32> to vector<1x1xf32>
    %111 = tpu.reciprocal %110 {approx = true} : vector<1x1xf32> -> vector<1x1xf32>
    %112 = vector.broadcast %111 : vector<1x1xf32> to vector<1x16xf32>
    %113 = arith.mulf %108, %112 : vector<1x16xf32>
    %114 = arith.truncf %113 : vector<1x16xf32> to vector<1x16xbf16>
    %115 = vector.extract_strided_slice %78 {offsets = [16, 0], sizes = [16, 128], strides = [1, 1]} : vector<32x128xbf16> to vector<16x128xbf16>
    %cst_53 = arith.constant dense<0.000000e+00> : vector<1x128xf32>
    %116 = tpu.matmul %114, %115, %cst_53 {dimension_numbers = #tpu.dot_dimension_numbers<[1], [0], [0], [1], [0, 0, 1, 1], [], []>} : vector<1x16xbf16>, vector<16x128xbf16>, vector<1x128xf32> -> vector<1x128xf32>
    %c1 = arith.constant 1 : index
    %c0_54 = arith.constant 0 : index
    %117 = vector.load %arg7[%c1, %c0_54] : memref<2x128xf32, #tpu.memory_space<vmem>>, vector<1x128xf32>
    tpu.vector_store %arg7[%c1, %c0_54], %116 {strides = array<i32>} : memref<2x128xf32, #tpu.memory_space<vmem>>, vector<1x128xf32>,
    return
  }
  func.func @transform_0(%arg0: i32) -> (i32, i32) {
    %c0_i32 = arith.constant 0 : i32
    %c0_i32_0 = arith.constant 0 : i32
    return %arg0, %c0_i32 : i32, i32
  }
  func.func @transform_1(%arg0: i32) -> (i32, i32) {
    %c0_i32 = arith.constant 0 : i32
    %c0_i32_0 = arith.constant 0 : i32
    %c0_i32_1 = arith.constant 0 : i32
    return %c0_i32, %c0_i32_0 : i32, i32
  }
  func.func @transform_2(%arg0: i32) -> (i32, i32) {
    %c0_i32 = arith.constant 0 : i32
    %c0_i32_0 = arith.constant 0 : i32
    %c0_i32_1 = arith.constant 0 : i32
    return %c0_i32, %c0_i32_0 : i32, i32
  }
  func.func @transform_3(%arg0: i32) -> (i32, i32) {
    %c0_i32 = arith.constant 0 : i32
    %c0_i32_0 = arith.constant 0 : i32
    %c0_i32_1 = arith.constant 0 : i32
    return %c0_i32, %c0_i32_0 : i32, i32
  }
  func.func @transform_4(%arg0: i32) -> (i32, i32) {
    %c0_i32 = arith.constant 0 : i32
    %c0_i32_0 = arith.constant 0 : i32
    %c0_i32_1 = arith.constant 0 : i32
    return %c0_i32, %c0_i32_0 : i32, i32
  }
  func.func @transform_5(%arg0: i32) -> (i32, i32) {
    %c0_i32 = arith.constant 0 : i32
    %c0_i32_0 = arith.constant 0 : i32
    %c0_i32_1 = arith.constant 0 : i32
    return %c0_i32, %c0_i32_0 : i32, i32
  }
  func.func @transform_6(%arg0: i32) -> (i32, i32) {
    %c0_i32 = arith.constant 0 : i32
    %c0_i32_0 = arith.constant 0 : i32
    return %arg0, %c0_i32 : i32, i32
  }
}

</mosaic_0001>

<llo_original>
// kernel: tpu_custom_call.1
$region0: #{tpu_custom_call.1}
  #allocation0 [shape = 'u32[]', space=smem, size = 0x4, offset = 0x4, fixed_abs, tag = 'smem constant byte address 0x4 - core index']
  #allocation1 [shape = 'u32[72,128]{1,0:T(1,128)}', space=vmem, size = 0x9000, scoped, tag = 'internal scratch']
  #allocation2 [shape = 'f32[32,128]{1,0:T(8,128)}', space=vmem, size = 0x4000, scoped, tag = 'scratch operand']
  %s0 = inlined_call_operand.vmem [shape: bf16[32,128], index: 0, kind: input, shape index: {}]
  %s1 = inlined_call_operand.hbm [shape: bf16[128,384], index: 1, kind: input, shape index: {}]
  %s2 = inlined_call_operand.vmem [shape: f32[1,384], index: 2, kind: input, shape index: {}]
  %s3 = inlined_call_operand.vmem [shape: bf16[128,32], index: 3, kind: input, shape index: {}]
  %s4 = inlined_call_operand.vmem [shape: f32[1,32], index: 4, kind: input, shape index: {}]
  %s5 = inlined_call_operand.vmem [shape: bf16[1,32], index: 5, kind: input, shape index: {}]
  %s6 = inlined_call_operand.hbm [shape: f32[2,128], index: 6, kind: output, shape index: {}]
  %s7 = sld [smem:[#allocation0]]
  $region38: #{tpu_custom_call.1} parent=0
    _
  %s9 = ssub.s32 1, %s7
  %s10 = scalar_select 0, %s9, %s7
  $region1: #{tpu_custom_call.1} parent=0
    #allocation3 [shape = 'u8[98304]{0}', space=vmem, size = 0x18000, scoped, tag = 'input window, operand 1, single buffered']
    #allocation4 [shape = 's32[1]{0}', space=sflag, size = 0x4, scoped, tag = 'scoped memory for tpu_custom_call.1']
    #allocation5 [shape = 's32[1]{0}', space=sflag, size = 0x4, scoped, tag = 'scoped memory for tpu_custom_call.1']
    #allocation6 [shape = 'u8[1024]{0}', space=vmem, size = 0x400, scoped, tag = 'output window, operand 0, single buffered']
    %11 = vsyncpa [#allocation4], 0
    %12 = vsyncpa [#allocation5], 0
    // Predicated region
    $region2: #{tpu_custom_call.1} parent=1 // pred_check
      _
    $region3: #{tpu_custom_call.1} parent=1 // pred_check_branch
      %14 = sbr.rel (0) target = $region5
    $region4: #{tpu_custom_call.1} parent=1 // pred_region
      _
    $region5: #{tpu_custom_call.1} parent=1 // pred_fallthru
      _
    // Predicated region
    $region6: #{tpu_custom_call.1} parent=1 // pred_check
      _
    $region7: #{tpu_custom_call.1} parent=1 // pred_check_branch
      %16 = sbr.rel (0) target = $region9
    $region8: #{tpu_custom_call.1} parent=1 // pred_region
      %18 = vsyncadd [#allocation4], 0
      %s19 = sshll.u32 %s1, 4
      %s20 = int_to_ptr.hbm [resolvable:$true] %s19
      %s21 = sshll.u32 [#allocation3], 4
      %s22 = int_to_ptr.vmem [resolvable:$true] %s21
      %27 = dma.hbm_to_vmem [thread:$0]  %s20, 3072, %s22, [#allocation4], 192, 192, 12
    $region9: #{tpu_custom_call.1} parent=1 // pred_fallthru
      _
    // Predicated region
    $region10: #{tpu_custom_call.1} parent=1 // pred_check
      _
    $region11: #{tpu_custom_call.1} parent=1 // pred_check_branch
      %29 = sbr.rel (0) target = $region13
    $region12: #{tpu_custom_call.1} parent=1 // pred_region
      _
    $region13: #{tpu_custom_call.1} parent=1 // pred_fallthru
      _
    // Predicated region
    $region14: #{tpu_custom_call.1} parent=1 // pred_check
      _
    $region15: #{tpu_custom_call.1} parent=1 // pred_check_branch
      %31 = sbr.rel (0) target = $region17
    $region16: #{tpu_custom_call.1} parent=1 // pred_region
      _
    $region17: #{tpu_custom_call.1} parent=1 // pred_fallthru
      _
    // Predicated region
    $region18: #{tpu_custom_call.1} parent=1 // pred_check
      _
    $region19: #{tpu_custom_call.1} parent=1 // pred_check_branch
      %33 = sbr.rel (0) target = $region21
    $region20: #{tpu_custom_call.1} parent=1 // pred_region
      _
    $region21: #{tpu_custom_call.1} parent=1 // pred_fallthru
      _
    // Predicated region
    $region22: #{tpu_custom_call.1} parent=1 // pred_check
      _
    $region23: #{tpu_custom_call.1} parent=1 // pred_check_branch
      %35 = sbr.rel (0) target = $region25
    $region24: #{tpu_custom_call.1} parent=1 // pred_region
      _
    $region25: #{tpu_custom_call.1} parent=1 // pred_fallthru
      _
    // Predicated region
    $region26: #{tpu_custom_call.1} parent=1 // pred_check
      _
    $region27: #{tpu_custom_call.1} parent=1 // pred_check_branch
      %37 = sbr.rel (0) target = $region29
    $region28: #{tpu_custom_call.1} parent=1 // pred_region
      %39 = dma.done [#allocation4], 3072
    $region29: #{tpu_custom_call.1} parent=1 // pred_fallthru
      _
    %v41 = vld [vmem:[%s0] sm:$0xf]
    %v42 = vld [vmem:[%s0 + $0x4] sm:$0xf]
    %v43 = vld [vmem:[%s0 + $0x8] sm:$0xf]
    %v44 = vld [vmem:[%s0 + $0xc] sm:$0xf]
    %v45 = vld [vmem:[#allocation3] sm:$0xff]
    %v46 = vld [vmem:[#allocation3 + $0x8] sm:$0xf]
    %v47 = vld [vmem:[#allocation3 + $0xc] sm:$0xff]
    %v48 = vld [vmem:[#allocation3 + $0x14] sm:$0xf]
    %v49 = vld [vmem:[#allocation3 + $0x18] sm:$0xff]
    %v50 = vld [vmem:[#allocation3 + $0x20] sm:$0xf]
    %v51 = vld [vmem:[#allocation3 + $0x24] sm:$0xff]
    %v52 = vld [vmem:[#allocation3 + $0x2c] sm:$0xf]
    %v53 = vld [vmem:[#allocation3 + $0x30] sm:$0xff]
    %v54 = vld [vmem:[#allocation3 + $0x38] sm:$0xf]
    %v55 = vld [vmem:[#allocation3 + $0x3c] sm:$0xff]
    %v56 = vld [vmem:[#allocation3 + $0x44] sm:$0xf]
    %v57 = vld [vmem:[#allocation3 + $0x48] sm:$0xff]
    %v58 = vld [vmem:[#allocation3 + $0x50] sm:$0xf]
    %v59 = vld [vmem:[#allocation3 + $0x54] sm:$0xff]
    %v60 = vld [vmem:[#allocation3 + $0x5c] sm:$0xf]
    %v61 = vld [vmem:[#allocation3 + $0x60] sm:$0xff]
    %v62 = vld [vmem:[#allocation3 + $0x68] sm:$0xf]
    %v63 = vld [vmem:[#allocation3 + $0x6c] sm:$0xff]
    %v64 = vld [vmem:[#allocation3 + $0x74] sm:$0xf]
    %v65 = vld [vmem:[#allocation3 + $0x78] sm:$0xff]
    %v66 = vld [vmem:[#allocation3 + $0x80] sm:$0xf]
    %v67 = vld [vmem:[#allocation3 + $0x84] sm:$0xff]
    %v68 = vld [vmem:[#allocation3 + $0x8c] sm:$0xf]
    %v69 = vld [vmem:[#allocation3 + $0x90] sm:$0xff]
    %v70 = vld [vmem:[#allocation3 + $0x98] sm:$0xf]
    %v71 = vld [vmem:[#allocation3 + $0x9c] sm:$0xff]
    %v72 = vld [vmem:[#allocation3 + $0xa4] sm:$0xf]
    %v73 = vld [vmem:[#allocation3 + $0xa8] sm:$0xff]
    %v74 = vld [vmem:[#allocation3 + $0xb0] sm:$0xf]
    %v75 = vld [vmem:[#allocation3 + $0xb4] sm:$0xff]
    %v76 = vld [vmem:[#allocation3 + $0xbc] sm:$0xf]
    %v77 = vld [vmem:[%s2] sm:$0x7]
    %v79 = vperm.slane %v77, 0
    %v80 = vperm.slane %v77, 1
    %v81 = vperm.slane %v77, 2
    %v89 = vunpack.c.l.b16 %v41
    %v90 = vunpack.c.l.b16 %v42
    %v91 = vunpack.c.l.b16 %v43
    %v92 = vunpack.c.l.b16 %v44
    %v93 = vpack.c.b16 %v90, %v89
    %v94 = vpack.c.b16 %v92, %v91
    %v129 = vunpack.c.l.b16 %v45
    %v130 = vunpack.c.h.b16 %v45
    %v131 = vunpack.c.l.b16 %v46
    %v132 = vunpack.c.l.b16 %v47
    %v133 = vunpack.c.h.b16 %v47
    %v134 = vunpack.c.l.b16 %v48
    %v135 = vunpack.c.l.b16 %v49
    %v136 = vunpack.c.h.b16 %v49
    %v137 = vunpack.c.l.b16 %v50
    %v138 = vunpack.c.l.b16 %v51
    %v139 = vunpack.c.h.b16 %v51
    %v140 = vunpack.c.l.b16 %v52
    %v141 = vunpack.c.l.b16 %v53
    %v142 = vunpack.c.h.b16 %v53
    %v143 = vunpack.c.l.b16 %v54
    %v144 = vunpack.c.l.b16 %v55
    %v145 = vunpack.c.h.b16 %v55
    %v146 = vunpack.c.l.b16 %v56
    %v147 = vunpack.c.l.b16 %v57
    %v148 = vunpack.c.h.b16 %v57
    %v149 = vunpack.c.l.b16 %v58
    %v150 = vunpack.c.l.b16 %v59
    %v151 = vunpack.c.h.b16 %v59
    %v152 = vunpack.c.l.b16 %v60
    %v153 = vunpack.c.l.b16 %v61
    %v154 = vunpack.c.h.b16 %v61
    %v155 = vunpack.c.l.b16 %v62
    %v156 = vunpack.c.l.b16 %v63
    %v157 = vunpack.c.h.b16 %v63
    %v158 = vunpack.c.l.b16 %v64
    %v159 = vunpack.c.l.b16 %v65
    %v160 = vunpack.c.h.b16 %v65
    %v161 = vunpack.c.l.b16 %v66
    %v162 = vunpack.c.l.b16 %v67
    %v163 = vunpack.c.h.b16 %v67
    %v164 = vunpack.c.l.b16 %v68
    %v165 = vunpack.c.l.b16 %v69
    %v166 = vunpack.c.h.b16 %v69
    %v167 = vunpack.c.l.b16 %v70
    %v168 = vunpack.c.l.b16 %v71
    %v169 = vunpack.c.h.b16 %v71
    %v170 = vunpack.c.l.b16 %v72
    %v171 = vunpack.c.l.b16 %v73
    %v172 = vunpack.c.h.b16 %v73
    %v173 = vunpack.c.l.b16 %v74
    %v174 = vunpack.c.l.b16 %v75
    %v175 = vunpack.c.h.b16 %v75
    %v176 = vunpack.c.l.b16 %v76
    %v177 = vpack.c.b16 %v132, %v129
    %v178 = vpack.c.b16 %v133, %v130
    %v179 = vpack.c.b16 %v134, %v131
    %v180 = vpack.c.b16 %v138, %v135
    %v181 = vpack.c.b16 %v139, %v136
    %v182 = vpack.c.b16 %v140, %v137
    %v183 = vpack.c.b16 %v144, %v141
    %v184 = vpack.c.b16 %v145, %v142
    %v185 = vpack.c.b16 %v146, %v143
    %v186 = vpack.c.b16 %v150, %v147
    %v187 = vpack.c.b16 %v151, %v148
    %v188 = vpack.c.b16 %v152, %v149
    %v189 = vpack.c.b16 %v156, %v153
    %v190 = vpack.c.b16 %v157, %v154
    %v191 = vpack.c.b16 %v158, %v155
    %v192 = vpack.c.b16 %v162, %v159
    %v193 = vpack.c.b16 %v163, %v160
    %v194 = vpack.c.b16 %v164, %v161
    %v195 = vpack.c.b16 %v168, %v165
    %v196 = vpack.c.b16 %v169, %v166
    %v197 = vpack.c.b16 %v170, %v167
    %v198 = vpack.c.b16 %v174, %v171
    %v199 = vpack.c.b16 %v175, %v172
    %v200 = vpack.c.b16 %v176, %v173
    %225 = vmatpush.bf16.msra.mxu0 %v198
    %226 = vmatpush.bf16.msra.mxu0 %v195
    %227 = vmatpush.bf16.msra.mxu0 %v192
    %228 = vmatpush.bf16.msra.mxu0 %v189
    %229 = vmatpush.bf16.msra.mxu0 %v186
    %230 = vmatpush.bf16.msra.mxu0 %v183
    %231 = vmatpush.bf16.msra.mxu0 %v180
    %232 = vmatpush.bf16.msra.mxu0 %v177
    %233 = vmatmul.bf16.gmra.mxu0 %v93
    %v234 = vpop.f32.mrf.mxu0
    %v235 = vadd.f32 %v79, %v234
    %v236 = vpop.f32.mrf.mxu0
    %v237 = vadd.f32 %v79, %v236
    %238 = vmatmul.bf16.gmra.mxu0 %v94
    %v239 = vpop.f32.mrf.mxu0
    %v240 = vadd.f32 %v79, %v239
    %v241 = vpop.f32.mrf.mxu0
    %v242 = vadd.f32 %v79, %v241
    %243 = vdwg.mxu0
    %244 = vmatpush.bf16.msra.mxu0 %v199
    %245 = vmatpush.bf16.msra.mxu0 %v196
    %246 = vmatpush.bf16.msra.mxu0 %v193
    %247 = vmatpush.bf16.msra.mxu0 %v190
    %248 = vmatpush.bf16.msra.mxu0 %v187
    %249 = vmatpush.bf16.msra.mxu0 %v184
    %250 = vmatpush.bf16.msra.mxu0 %v181
    %251 = vmatpush.bf16.msra.mxu0 %v178
    %252 = vmatmul.bf16.gmra.mxu0 %v93
    %v253 = vpop.f32.mrf.mxu0
    %v254 = vadd.f32 %v80, %v253
    %v255 = vpop.f32.mrf.mxu0
    %v256 = vadd.f32 %v80, %v255
    %257 = vmatmul.bf16.gmra.mxu0 %v94
    %v258 = vpop.f32.mrf.mxu0
    %v259 = vadd.f32 %v80, %v258
    %v260 = vpop.f32.mrf.mxu0
    %v261 = vadd.f32 %v80, %v260
    %262 = vdwg.mxu0
    %263 = vmatpush.bf16.msra.mxu0 %v200
    %264 = vmatpush.bf16.msra.mxu0 %v197
    %265 = vmatpush.bf16.msra.mxu0 %v194
    %266 = vmatpush.bf16.msra.mxu0 %v191
    %267 = vmatpush.bf16.msra.mxu0 %v188
    %268 = vmatpush.bf16.msra.mxu0 %v185
    %269 = vmatpush.bf16.msra.mxu0 %v182
    %270 = vmatpush.bf16.msra.mxu0 %v179
    %271 = vmatmul.bf16.gmra.mxu0 %v93
    %v272 = vpop.f32.mrf.mxu0
    %v273 = vadd.f32 %v81, %v272
    %v274 = vpop.f32.mrf.mxu0
    %v275 = vadd.f32 %v81, %v274
    %276 = vmatmul.bf16.gmra.mxu0 %v94
    %v277 = vpop.f32.mrf.mxu0
    %v278 = vadd.f32 %v81, %v277
    %v279 = vpop.f32.mrf.mxu0
    %v280 = vadd.f32 %v81, %v279
    %281 = vdwg.mxu0
    %v282 = vpack.c.bf16 %v254, %v235
    %v283 = vpack.c.bf16 %v273, %v273
    %v284 = vpack.c.bf16 %v256, %v237
    %v285 = vpack.c.bf16 %v275, %v275
    %v286 = vpack.c.bf16 %v259, %v240
    %v287 = vpack.c.bf16 %v278, %v278
    %v288 = vpack.c.bf16 %v261, %v242
    %v289 = vpack.c.bf16 %v280, %v280
    %v292 = vunpack.c.l.b16 %v282
    %v293 = vunpack.c.l.b16 %v284
    %v294 = vpack.c.b16 %v293, %v292
    %v295 = vunpack.c.h.b16 %v282
    %v296 = vunpack.c.h.b16 %v284
    %v297 = vpack.c.b16 %v296, %v295
    %vm298 = vcmask 261120
    %v300 = vsel %vm298, %v294, 0
    %v303 = vsel %vm298, %v297, 0
    %305 = vmatpush.bf16.xpose.msra.mxu0 0
    %306 = vmatpush.bf16.xpose.msra.mxu0 0
    %307 = vmatpush.bf16.xpose.msra.mxu0 0
    %308 = vmatpush.bf16.xpose.msra.mxu0 0
    %309 = vmatpush.bf16.xpose.msra.mxu0 0
    %310 = vmatpush.bf16.xpose.msra.mxu0 0
    %311 = vmatpush.bf16.xpose.msra.mxu0 0
    %312 = vmatpush.bf16.xpose.msra.mxu0 %v303
    %313 = vmatmul.bf16.gmra.mxu0 %v300
    %v314 = vpop.f32.mrf.mxu0
    %v315 = vadd.f32 0.0, %v314
    %v316 = vpop.f32.mrf.mxu0
    %v317 = vadd.f32 0.0, %v316
    %318 = vdwg.mxu0
    %319 = vrot.lane.b32.xlu0 %v294, 96
    %v320 = vpop.permute.xlu0 %319
    %321 = vrot.lane.b32.xlu0 %v297, 96
    %v322 = vpop.permute.xlu0 %321
    %v324 = vsel %vm298, %v320, 0
    %v327 = vsel %vm298, %v322, 0
    %329 = vmatpush.bf16.xpose.msra.mxu0 0
    %330 = vmatpush.bf16.xpose.msra.mxu0 0
    %331 = vmatpush.bf16.xpose.msra.mxu0 0
    %332 = vmatpush.bf16.xpose.msra.mxu0 0
    %333 = vmatpush.bf16.xpose.msra.mxu0 0
    %334 = vmatpush.bf16.xpose.msra.mxu0 0
    %335 = vmatpush.bf16.xpose.msra.mxu0 0
    %336 = vmatpush.bf16.xpose.msra.mxu0 %v327
    %337 = vmatmul.bf16.gmra.mxu0 %v324
    %v338 = vpop.f32.mrf.mxu0
    %v339 = vadd.f32 0.0, %v338
    %v340 = vpop.f32.mrf.mxu0
    %v341 = vadd.f32 0.0, %v340
    %342 = vdwg.mxu0
    %343 = vrot.lane.b32.xlu0 %v294, 64
    %v344 = vpop.permute.xlu0 %343
    %345 = vrot.lane.b32.xlu0 %v297, 64
    %v346 = vpop.permute.xlu0 %345
    %v348 = vsel %vm298, %v344, 0
    %v351 = vsel %vm298, %v346, 0
    %353 = vmatpush.bf16.xpose.msra.mxu0 0
    %354 = vmatpush.bf16.xpose.msra.mxu0 0
    %355 = vmatpush.bf16.xpose.msra.mxu0 0
    %356 = vmatpush.bf16.xpose.msra.mxu0 0
    %357 = vmatpush.bf16.xpose.msra.mxu0 0
    %358 = vmatpush.bf16.xpose.msra.mxu0 0
    %359 = vmatpush.bf16.xpose.msra.mxu0 0
    %360 = vmatpush.bf16.xpose.msra.mxu0 %v351
    %361 = vmatmul.bf16.gmra.mxu0 %v348
    %v362 = vpop.f32.mrf.mxu0
    %v363 = vadd.f32 0.0, %v362
    %v364 = vpop.f32.mrf.mxu0
    %v365 = vadd.f32 0.0, %v364
    %366 = vdwg.mxu0
    %367 = vrot.lane.b32.xlu0 %v294, 32
    %v368 = vpop.permute.xlu0 %367
    %369 = vrot.lane.b32.xlu0 %v297, 32
    %v370 = vpop.permute.xlu0 %369
    %v372 = vsel %vm298, %v368, 0
    %v375 = vsel %vm298, %v370, 0
    %377 = vmatpush.bf16.xpose.msra.mxu0 0
    %378 = vmatpush.bf16.xpose.msra.mxu0 0
    %379 = vmatpush.bf16.xpose.msra.mxu0 0
    %380 = vmatpush.bf16.xpose.msra.mxu0 0
    %381 = vmatpush.bf16.xpose.msra.mxu0 0
    %382 = vmatpush.bf16.xpose.msra.mxu0 0
    %383 = vmatpush.bf16.xpose.msra.mxu0 0
    %384 = vmatpush.bf16.xpose.msra.mxu0 %v375
    %385 = vmatmul.bf16.gmra.mxu0 %v372
    %v386 = vpop.f32.mrf.mxu0
    %v387 = vadd.f32 0.0, %v386
    %v388 = vpop.f32.mrf.mxu0
    %v389 = vadd.f32 0.0, %v388
    %390 = vdwg.mxu0
    %v393 = vunpack.c.l.b16 %v286
    %v394 = vunpack.c.l.b16 %v288
    %v395 = vpack.c.b16 %v394, %v393
    %v396 = vunpack.c.h.b16 %v286
    %v397 = vunpack.c.h.b16 %v288
    %v398 = vpack.c.b16 %v397, %v396
    %v400 = vsel %vm298, %v395, 0
    %v403 = vsel %vm298, %v398, 0
    %405 = vmatpush.bf16.xpose.msra.mxu0 0
    %406 = vmatpush.bf16.xpose.msra.mxu0 0
    %407 = vmatpush.bf16.xpose.msra.mxu0 0
    %408 = vmatpush.bf16.xpose.msra.mxu0 0
    %409 = vmatpush.bf16.xpose.msra.mxu0 0
    %410 = vmatpush.bf16.xpose.msra.mxu0 0
    %411 = vmatpush.bf16.xpose.msra.mxu0 0
    %412 = vmatpush.bf16.xpose.msra.mxu0 %v403
    %413 = vmatmul.bf16.gmra.mxu0 %v400
    %v414 = vpop.f32.mrf.mxu0
    %v415 = vadd.f32 0.0, %v414
    %v416 = vpop.f32.mrf.mxu0
    %v417 = vadd.f32 0.0, %v416
    %418 = vdwg.mxu0
    %419 = vrot.lane.b32.xlu0 %v395, 96
    %v420 = vpop.permute.xlu0 %419
    %421 = vrot.lane.b32.xlu0 %v398, 96
    %v422 = vpop.permute.xlu0 %421
    %v424 = vsel %vm298, %v420, 0
    %v427 = vsel %vm298, %v422, 0
    %429 = vmatpush.bf16.xpose.msra.mxu0 0
    %430 = vmatpush.bf16.xpose.msra.mxu0 0
    %431 = vmatpush.bf16.xpose.msra.mxu0 0
    %432 = vmatpush.bf16.xpose.msra.mxu0 0
    %433 = vmatpush.bf16.xpose.msra.mxu0 0
    %434 = vmatpush.bf16.xpose.msra.mxu0 0
    %435 = vmatpush.bf16.xpose.msra.mxu0 0
    %436 = vmatpush.bf16.xpose.msra.mxu0 %v427
    %437 = vmatmul.bf16.gmra.mxu0 %v424
    %v438 = vpop.f32.mrf.mxu0
    %v439 = vadd.f32 0.0, %v438
    %v440 = vpop.f32.mrf.mxu0
    %v441 = vadd.f32 0.0, %v440
    %442 = vdwg.mxu0
    %443 = vrot.lane.b32.xlu0 %v395, 64
    %v444 = vpop.permute.xlu0 %443
    %445 = vrot.lane.b32.xlu0 %v398, 64
    %v446 = vpop.permute.xlu0 %445
    %v448 = vsel %vm298, %v444, 0
    %v451 = vsel %vm298, %v446, 0
    %453 = vmatpush.bf16.xpose.msra.mxu0 0
    %454 = vmatpush.bf16.xpose.msra.mxu0 0
    %455 = vmatpush.bf16.xpose.msra.mxu0 0
    %456 = vmatpush.bf16.xpose.msra.mxu0 0
    %457 = vmatpush.bf16.xpose.msra.mxu0 0
    %458 = vmatpush.bf16.xpose.msra.mxu0 0
    %459 = vmatpush.bf16.xpose.msra.mxu0 0
    %460 = vmatpush.bf16.xpose.msra.mxu0 %v451
    %461 = vmatmul.bf16.gmra.mxu0 %v448
    %v462 = vpop.f32.mrf.mxu0
    %v463 = vadd.f32 0.0, %v462
    %v464 = vpop.f32.mrf.mxu0
    %v465 = vadd.f32 0.0, %v464
    %466 = vdwg.mxu0
    %467 = vrot.lane.b32.xlu0 %v395, 32
    %v468 = vpop.permute.xlu0 %467
    %469 = vrot.lane.b32.xlu0 %v398, 32
    %v470 = vpop.permute.xlu0 %469
    %v472 = vsel %vm298, %v468, 0
    %v475 = vsel %vm298, %v470, 0
    %477 = vmatpush.bf16.xpose.msra.mxu0 0
    %478 = vmatpush.bf16.xpose.msra.mxu0 0
    %479 = vmatpush.bf16.xpose.msra.mxu0 0
    %480 = vmatpush.bf16.xpose.msra.mxu0 0
    %481 = vmatpush.bf16.xpose.msra.mxu0 0
    %482 = vmatpush.bf16.xpose.msra.mxu0 0
    %483 = vmatpush.bf16.xpose.msra.mxu0 0
    %484 = vmatpush.bf16.xpose.msra.mxu0 %v475
    %485 = vmatmul.bf16.gmra.mxu0 %v472
    %v486 = vpop.f32.mrf.mxu0
    %v487 = vadd.f32 0.0, %v486
    %v488 = vpop.f32.mrf.mxu0
    %v489 = vadd.f32 0.0, %v488
    %490 = vdwg.mxu0
    %v491 = vmul.f32 %v315, 0.17677669
    %v492 = vmul.f32 %v317, 0.17677669
    %v493 = vmul.f32 %v339, 0.17677669
    %v494 = vmul.f32 %v341, 0.17677669
    %v495 = vmul.f32 %v363, 0.17677669
    %v496 = vmul.f32 %v365, 0.17677669
    %v497 = vmul.f32 %v387, 0.17677669
    %v498 = vmul.f32 %v389, 0.17677669
    %v499 = vmul.f32 %v415, 0.17677669
    %v500 = vmul.f32 %v417, 0.17677669
    %v501 = vmul.f32 %v439, 0.17677669
    %v502 = vmul.f32 %v441, 0.17677669
    %v503 = vmul.f32 %v463, 0.17677669
    %v504 = vmul.f32 %v465, 0.17677669
    %v505 = vmul.f32 %v487, 0.17677669
    %v506 = vmul.f32 %v489, 0.17677669
    %vm507 = vcmask 130048
    %v508 = vsel %vm507, %v491, -inf
    %509 = vmax.xlane.f32.xlu0 %v508
    %v510 = vpop.xlane.xlu0 %509
    %v511 = vsel %vm507, %v492, -inf
    %512 = vmax.xlane.f32.xlu0 %v511
    %v513 = vpop.xlane.xlu0 %512
    %v514 = vsel %vm507, %v493, -inf
    %515 = vmax.xlane.f32.xlu0 %v514
    %v516 = vpop.xlane.xlu0 %515
    %v517 = vsel %vm507, %v494, -inf
    %518 = vmax.xlane.f32.xlu0 %v517
    %v519 = vpop.xlane.xlu0 %518
    %v520 = vsel %vm507, %v495, -inf
    %521 = vmax.xlane.f32.xlu0 %v520
    %v522 = vpop.xlane.xlu0 %521
    %v523 = vsel %vm507, %v496, -inf
    %524 = vmax.xlane.f32.xlu0 %v523
    %v525 = vpop.xlane.xlu0 %524
    %v526 = vsel %vm507, %v497, -inf
    %527 = vmax.xlane.f32.xlu0 %v526
    %v528 = vpop.xlane.xlu0 %527
    %v529 = vsel %vm507, %v498, -inf
    %530 = vmax.xlane.f32.xlu0 %v529
    %v531 = vpop.xlane.xlu0 %530
    %v532 = vsel %vm507, %v499, -inf
    %533 = vmax.xlane.f32.xlu0 %v532
    %v534 = vpop.xlane.xlu0 %533
    %v535 = vsel %vm507, %v500, -inf
    %536 = vmax.xlane.f32.xlu0 %v535
    %v537 = vpop.xlane.xlu0 %536
    %v538 = vsel %vm507, %v501, -inf
    %539 = vmax.xlane.f32.xlu0 %v538
    %v540 = vpop.xlane.xlu0 %539
    %v541 = vsel %vm507, %v502, -inf
    %542 = vmax.xlane.f32.xlu0 %v541
    %v543 = vpop.xlane.xlu0 %542
    %v544 = vsel %vm507, %v503, -inf
    %545 = vmax.xlane.f32.xlu0 %v544
    %v546 = vpop.xlane.xlu0 %545
    %v547 = vsel %vm507, %v504, -inf
    %548 = vmax.xlane.f32.xlu0 %v547
    %v549 = vpop.xlane.xlu0 %548
    %v550 = vsel %vm507, %v505, -inf
    %551 = vmax.xlane.f32.xlu0 %v550
    %v552 = vpop.xlane.xlu0 %551
    %v553 = vsel %vm507, %v506, -inf
    %554 = vmax.xlane.f32.xlu0 %v553
    %v555 = vpop.xlane.xlu0 %554
    %v556 = vsub.f32 %v491, %v510
    %v557 = vsub.f32 %v492, %v513
    %v558 = vsub.f32 %v493, %v516
    %v559 = vsub.f32 %v494, %v519
    %v560 = vsub.f32 %v495, %v522
    %v561 = vsub.f32 %v496, %v525
    %v562 = vsub.f32 %v497, %v528
    %v563 = vsub.f32 %v498, %v531
    %v564 = vsub.f32 %v499, %v534
    %v565 = vsub.f32 %v500, %v537
    %v566 = vsub.f32 %v501, %v540
    %v567 = vsub.f32 %v502, %v543
    %v568 = vsub.f32 %v503, %v546
    %v569 = vsub.f32 %v504, %v549
    %v570 = vsub.f32 %v505, %v552
    %v571 = vsub.f32 %v506, %v555
    %v572 = vmul.f32 %v556, 1.442695
    %v573 = vpow.pop %v572
    %v574 = vmul.f32 %v557, 1.442695
    %v575 = vpow.pop %v574
    %v576 = vmul.f32 %v558, 1.442695
    %v577 = vpow.pop %v576
    %v578 = vmul.f32 %v559, 1.442695
    %v579 = vpow.pop %v578
    %v580 = vmul.f32 %v560, 1.442695
    %v581 = vpow.pop %v580
    %v582 = vmul.f32 %v561, 1.442695
    %v583 = vpow.pop %v582
    %v584 = vmul.f32 %v562, 1.442695
    %v585 = vpow.pop %v584
    %v586 = vmul.f32 %v563, 1.442695
    %v587 = vpow.pop %v586
    %v588 = vmul.f32 %v564, 1.442695
    %v589 = vpow.pop %v588
    %v590 = vmul.f32 %v565, 1.442695
    %v591 = vpow.pop %v590
    %v592 = vmul.f32 %v566, 1.442695
    %v593 = vpow.pop %v592
    %v594 = vmul.f32 %v567, 1.442695
    %v595 = vpow.pop %v594
    %v596 = vmul.f32 %v568, 1.442695
    %v597 = vpow.pop %v596
    %v598 = vmul.f32 %v569, 1.442695
    %v599 = vpow.pop %v598
    %v600 = vmul.f32 %v570, 1.442695
    %v601 = vpow.pop %v600
    %v602 = vmul.f32 %v571, 1.442695
    %v603 = vpow.pop %v602
    %v604 = vsel %vm507, %v573, 0.0
    %605 = vadd.xlane.f32.xlu0 %v604
    %v606 = vpop.xlane.xlu0 %605
    %v607 = vsel %vm507, %v575, 0.0
    %608 = vadd.xlane.f32.xlu0 %v607
    %v609 = vpop.xlane.xlu0 %608
    %v610 = vsel %vm507, %v577, 0.0
    %611 = vadd.xlane.f32.xlu0 %v610
    %v612 = vpop.xlane.xlu0 %611
    %v613 = vsel %vm507, %v579, 0.0
    %614 = vadd.xlane.f32.xlu0 %v613
    %v615 = vpop.xlane.xlu0 %614
    %v616 = vsel %vm507, %v581, 0.0
    %617 = vadd.xlane.f32.xlu0 %v616
    %v618 = vpop.xlane.xlu0 %617
    %v619 = vsel %vm507, %v583, 0.0
    %620 = vadd.xlane.f32.xlu0 %v619
    %v621 = vpop.xlane.xlu0 %620
    %v622 = vsel %vm507, %v585, 0.0
    %623 = vadd.xlane.f32.xlu0 %v622
    %v624 = vpop.xlane.xlu0 %623
    %v625 = vsel %vm507, %v587, 0.0
    %626 = vadd.xlane.f32.xlu0 %v625
    %v627 = vpop.xlane.xlu0 %626
    %v628 = vsel %vm507, %v589, 0.0
    %629 = vadd.xlane.f32.xlu0 %v628
    %v630 = vpop.xlane.xlu0 %629
    %v631 = vsel %vm507, %v591, 0.0
    %632 = vadd.xlane.f32.xlu0 %v631
    %v633 = vpop.xlane.xlu0 %632
    %v634 = vsel %vm507, %v593, 0.0
    %635 = vadd.xlane.f32.xlu0 %v634
    %v636 = vpop.xlane.xlu0 %635
    %v637 = vsel %vm507, %v595, 0.0
    %638 = vadd.xlane.f32.xlu0 %v637
    %v639 = vpop.xlane.xlu0 %638
    %v640 = vsel %vm507, %v597, 0.0
    %641 = vadd.xlane.f32.xlu0 %v640
    %v642 = vpop.xlane.xlu0 %641
    %v643 = vsel %vm507, %v599, 0.0
    %644 = vadd.xlane.f32.xlu0 %v643
    %v645 = vpop.xlane.xlu0 %644
    %v646 = vsel %vm507, %v601, 0.0
    %647 = vadd.xlane.f32.xlu0 %v646
    %v648 = vpop.xlane.xlu0 %647
    %v649 = vsel %vm507, %v603, 0.0
    %650 = vadd.xlane.f32.xlu0 %v649
    %v651 = vpop.xlane.xlu0 %650
    %v652 = vrcp.pop %v606
    %v653 = vrcp.pop %v609
    %v654 = vrcp.pop %v612
    %v655 = vrcp.pop %v615
    %v656 = vrcp.pop %v618
    %v657 = vrcp.pop %v621
    %v658 = vrcp.pop %v624
    %v659 = vrcp.pop %v627
    %v660 = vrcp.pop %v630
    %v661 = vrcp.pop %v633
    %v662 = vrcp.pop %v636
    %v663 = vrcp.pop %v639
    %v664 = vrcp.pop %v642
    %v665 = vrcp.pop %v645
    %v666 = vrcp.pop %v648
    %v667 = vrcp.pop %v651
    %v668 = vmul.f32 %v573, %v652
    %v669 = vmul.f32 %v575, %v653
    %v670 = vmul.f32 %v577, %v654
    %v671 = vmul.f32 %v579, %v655
    %v672 = vmul.f32 %v581, %v656
    %v673 = vmul.f32 %v583, %v657
    %v674 = vmul.f32 %v585, %v658
    %v675 = vmul.f32 %v587, %v659
    %v676 = vmul.f32 %v589, %v660
    %v677 = vmul.f32 %v591, %v661
    %v678 = vmul.f32 %v593, %v662
    %v679 = vmul.f32 %v595, %v663
    %v680 = vmul.f32 %v597, %v664
    %v681 = vmul.f32 %v599, %v665
    %v682 = vmul.f32 %v601, %v666
    %v683 = vmul.f32 %v603, %v667
    %v684 = vpack.c.bf16 %v668, %v668
    %v685 = vpack.c.bf16 %v669, %v669
    %v686 = vpack.c.bf16 %v670, %v670
    %v687 = vpack.c.bf16 %v671, %v671
    %v688 = vpack.c.bf16 %v672, %v672
    %v689 = vpack.c.bf16 %v673, %v673
    %v690 = vpack.c.bf16 %v674, %v674
    %v691 = vpack.c.bf16 %v675, %v675
    %v692 = vpack.c.bf16 %v676, %v676
    %v693 = vpack.c.bf16 %v677, %v677
    %v694 = vpack.c.bf16 %v678, %v678
    %v695 = vpack.c.bf16 %v679, %v679
    %v696 = vpack.c.bf16 %v680, %v680
    %v697 = vpack.c.bf16 %v681, %v681
    %v698 = vpack.c.bf16 %v682, %v682
    %v699 = vpack.c.bf16 %v683, %v683
    %v702 = vunpack.c.l.b16 %v684
    %v703 = vunpack.c.l.b16 %v685
    %v704 = vpack.c.b16 %v703, %v702
    %v707 = vunpack.c.l.b16 %v283
    %v708 = vunpack.c.l.b16 %v285
    %v709 = vpack.c.b16 %v708, %v707
    %v712 = vsel %vm507, %v704, 0
    %714 = vmatpush.bf16.msra.mxu0 0
    %715 = vmatpush.bf16.msra.mxu0 0
    %716 = vmatpush.bf16.msra.mxu0 0
    %717 = vmatpush.bf16.msra.mxu0 0
    %718 = vmatpush.bf16.msra.mxu0 0
    %719 = vmatpush.bf16.msra.mxu0 0
    %720 = vmatpush.bf16.msra.mxu0 0
    %721 = vmatpush.bf16.msra.mxu0 %v709
    %722 = vmatmul.bf16.gmra.mxu0 %v712
    %v723 = vpop.f32.mrf.mxu0
    %v724 = vadd.f32 0.0, %v723
    %v725 = vpop.f32.mrf.mxu0
    %v726 = vadd.f32 0.0, %v725
    %727 = vdwg.mxu0
    %728 = vst.msk [vmem:[#allocation2] sm:$0xff] %vm298, %v724
    %729 = vst.msk [vmem:[#allocation2 + $0x8] sm:$0xff] %vm298, %v726
    %v732 = vunpack.c.l.b16 %v686
    %v733 = vunpack.c.l.b16 %v687
    %v734 = vpack.c.b16 %v733, %v732
    %735 = vrot.lane.b32.xlu0 %v709, 96
    %v736 = vpop.permute.xlu0 %735
    %v739 = vsel %vm507, %v734, 0
    %741 = vmatpush.bf16.msra.mxu0 0
    %742 = vmatpush.bf16.msra.mxu0 0
    %743 = vmatpush.bf16.msra.mxu0 0
    %744 = vmatpush.bf16.msra.mxu0 0
    %745 = vmatpush.bf16.msra.mxu0 0
    %746 = vmatpush.bf16.msra.mxu0 0
    %747 = vmatpush.bf16.msra.mxu0 0
    %748 = vmatpush.bf16.msra.mxu0 %v736
    %749 = vmatmul.bf16.gmra.mxu0 %v739
    %v750 = vpop.f32.mrf.mxu0
    %v751 = vadd.f32 0.0, %v750
    %v752 = vpop.f32.mrf.mxu0
    %v753 = vadd.f32 0.0, %v752
    %754 = vdwg.mxu0
    %757 = vrot.lane.b32.xlu0 %v751, 32
    %v758 = vpop.permute.xlu0 %757
    %759 = vrot.lane.b32.xlu0 %v753, 32
    %v760 = vpop.permute.xlu0 %759
    %vm763 = vcmask 523520
    %764 = vst.msk [vmem:[#allocation2] sm:$0xff] %vm763, %v758
    %765 = vst.msk [vmem:[#allocation2 + $0x8] sm:$0xff] %vm763, %v760
    %v768 = vunpack.c.l.b16 %v688
    %v769 = vunpack.c.l.b16 %v689
    %v770 = vpack.c.b16 %v769, %v768
    %771 = vrot.lane.b32.xlu0 %v709, 64
    %v772 = vpop.permute.xlu0 %771
    %v775 = vsel %vm507, %v770, 0
    %777 = vmatpush.bf16.msra.mxu0 0
    %778 = vmatpush.bf16.msra.mxu0 0
    %779 = vmatpush.bf16.msra.mxu0 0
    %780 = vmatpush.bf16.msra.mxu0 0
    %781 = vmatpush.bf16.msra.mxu0 0
    %782 = vmatpush.bf16.msra.mxu0 0
    %783 = vmatpush.bf16.msra.mxu0 0
    %784 = vmatpush.bf16.msra.mxu0 %v772
    %785 = vmatmul.bf16.gmra.mxu0 %v775
    %v786 = vpop.f32.mrf.mxu0
    %v787 = vadd.f32 0.0, %v786
    %v788 = vpop.f32.mrf.mxu0
    %v789 = vadd.f32 0.0, %v788
    %790 = vdwg.mxu0
    %793 = vrot.lane.b32.xlu0 %v787, 64
    %v794 = vpop.permute.xlu0 %793
    %795 = vrot.lane.b32.xlu0 %v789, 64
    %v796 = vpop.permute.xlu0 %795
    %vm799 = vcmask 785920
    %800 = vst.msk [vmem:[#allocation2] sm:$0xff] %vm799, %v794
    %801 = vst.msk [vmem:[#allocation2 + $0x8] sm:$0xff] %vm799, %v796
    %v804 = vunpack.c.l.b16 %v690
    %v805 = vunpack.c.l.b16 %v691
    %v806 = vpack.c.b16 %v805, %v804
    %807 = vrot.lane.b32.xlu0 %v709, 32
    %v808 = vpop.permute.xlu0 %807
    %v811 = vsel %vm507, %v806, 0
    %813 = vmatpush.bf16.msra.mxu0 0
    %814 = vmatpush.bf16.msra.mxu0 0
    %815 = vmatpush.bf16.msra.mxu0 0
    %816 = vmatpush.bf16.msra.mxu0 0
    %817 = vmatpush.bf16.msra.mxu0 0
    %818 = vmatpush.bf16.msra.mxu0 0
    %819 = vmatpush.bf16.msra.mxu0 0
    %820 = vmatpush.bf16.msra.mxu0 %v808
    %821 = vmatmul.bf16.gmra.mxu0 %v811
    %v822 = vpop.f32.mrf.mxu0
    %v823 = vadd.f32 0.0, %v822
    %v824 = vpop.f32.mrf.mxu0
    %v825 = vadd.f32 0.0, %v824
    %826 = vdwg.mxu0
    %829 = vrot.lane.b32.xlu0 %v823, 96
    %v830 = vpop.permute.xlu0 %829
    %831 = vrot.lane.b32.xlu0 %v825, 96
    %v832 = vpop.permute.xlu0 %831
    %vm835 = vcmask 1048320
    %836 = vst.msk [vmem:[#allocation2] sm:$0xff] %vm835, %v830
    %837 = vst.msk [vmem:[#allocation2 + $0x8] sm:$0xff] %vm835, %v832
    %v840 = vunpack.c.l.b16 %v692
    %v841 = vunpack.c.l.b16 %v693
    %v842 = vpack.c.b16 %v841, %v840
    %v845 = vunpack.c.l.b16 %v287
    %v846 = vunpack.c.l.b16 %v289
    %v847 = vpack.c.b16 %v846, %v845
    %v850 = vsel %vm507, %v842, 0
    %852 = vmatpush.bf16.msra.mxu0 0
    %853 = vmatpush.bf16.msra.mxu0 0
    %854 = vmatpush.bf16.msra.mxu0 0
    %855 = vmatpush.bf16.msra.mxu0 0
    %856 = vmatpush.bf16.msra.mxu0 0
    %857 = vmatpush.bf16.msra.mxu0 0
    %858 = vmatpush.bf16.msra.mxu0 0
    %859 = vmatpush.bf16.msra.mxu0 %v847
    %860 = vmatmul.bf16.gmra.mxu0 %v850
    %v861 = vpop.f32.mrf.mxu0
    %v862 = vadd.f32 0.0, %v861
    %v863 = vpop.f32.mrf.mxu0
    %v864 = vadd.f32 0.0, %v863
    %865 = vdwg.mxu0
    %866 = vst.msk [vmem:[#allocation2 + $0x10] sm:$0xff] %vm298, %v862
    %867 = vst.msk [vmem:[#allocation2 + $0x18] sm:$0xff] %vm298, %v864
    %v870 = vunpack.c.l.b16 %v694
    %v871 = vunpack.c.l.b16 %v695
    %v872 = vpack.c.b16 %v871, %v870
    %873 = vrot.lane.b32.xlu0 %v847, 96
    %v874 = vpop.permute.xlu0 %873
    %v877 = vsel %vm507, %v872, 0
    %879 = vmatpush.bf16.msra.mxu0 0
    %880 = vmatpush.bf16.msra.mxu0 0
    %881 = vmatpush.bf16.msra.mxu0 0
    %882 = vmatpush.bf16.msra.mxu0 0
    %883 = vmatpush.bf16.msra.mxu0 0
    %884 = vmatpush.bf16.msra.mxu0 0
    %885 = vmatpush.bf16.msra.mxu0 0
    %886 = vmatpush.bf16.msra.mxu0 %v874
    %887 = vmatmul.bf16.gmra.mxu0 %v877
    %v888 = vpop.f32.mrf.mxu0
    %v889 = vadd.f32 0.0, %v888
    %v890 = vpop.f32.mrf.mxu0
    %v891 = vadd.f32 0.0, %v890
    %892 = vdwg.mxu0
    %895 = vrot.lane.b32.xlu0 %v889, 32
    %v896 = vpop.permute.xlu0 %895
    %897 = vrot.lane.b32.xlu0 %v891, 32
    %v898 = vpop.permute.xlu0 %897
    %901 = vst.msk [vmem:[#allocation2 + $0x10] sm:$0xff] %vm763, %v896
    %902 = vst.msk [vmem:[#allocation2 + $0x18] sm:$0xff] %vm763, %v898
    %v905 = vunpack.c.l.b16 %v696
    %v906 = vunpack.c.l.b16 %v697
    %v907 = vpack.c.b16 %v906, %v905
    %908 = vrot.lane.b32.xlu0 %v847, 64
    %v909 = vpop.permute.xlu0 %908
    %v912 = vsel %vm507, %v907, 0
    %914 = vmatpush.bf16.msra.mxu0 0
    %915 = vmatpush.bf16.msra.mxu0 0
    %916 = vmatpush.bf16.msra.mxu0 0
    %917 = vmatpush.bf16.msra.mxu0 0
    %918 = vmatpush.bf16.msra.mxu0 0
    %919 = vmatpush.bf16.msra.mxu0 0
    %920 = vmatpush.bf16.msra.mxu0 0
    %921 = vmatpush.bf16.msra.mxu0 %v909
    %922 = vmatmul.bf16.gmra.mxu0 %v912
    %v923 = vpop.f32.mrf.mxu0
    %v924 = vadd.f32 0.0, %v923
    %v925 = vpop.f32.mrf.mxu0
    %v926 = vadd.f32 0.0, %v925
    %927 = vdwg.mxu0
    %930 = vrot.lane.b32.xlu0 %v924, 64
    %v931 = vpop.permute.xlu0 %930
    %932 = vrot.lane.b32.xlu0 %v926, 64
    %v933 = vpop.permute.xlu0 %932
    %936 = vst.msk [vmem:[#allocation2 + $0x10] sm:$0xff] %vm799, %v931
    %937 = vst.msk [vmem:[#allocation2 + $0x18] sm:$0xff] %vm799, %v933
    %v940 = vunpack.c.l.b16 %v698
    %v941 = vunpack.c.l.b16 %v699
    %v942 = vpack.c.b16 %v941, %v940
    %943 = vrot.lane.b32.xlu0 %v847, 32
    %v944 = vpop.permute.xlu0 %943
    %v947 = vsel %vm507, %v942, 0
    %949 = vmatpush.bf16.msra.mxu0 0
    %950 = vmatpush.bf16.msra.mxu0 0
    %951 = vmatpush.bf16.msra.mxu0 0
    %952 = vmatpush.bf16.msra.mxu0 0
    %953 = vmatpush.bf16.msra.mxu0 0
    %954 = vmatpush.bf16.msra.mxu0 0
    %955 = vmatpush.bf16.msra.mxu0 0
    %956 = vmatpush.bf16.msra.mxu0 %v944
    %957 = vmatmul.bf16.gmra.mxu0 %v947
    %v958 = vpop.f32.mrf.mxu0
    %v959 = vadd.f32 0.0, %v958
    %v960 = vpop.f32.mrf.mxu0
    %v961 = vadd.f32 0.0, %v960
    %962 = vdwg.mxu0
    %965 = vrot.lane.b32.xlu0 %v959, 96
    %v966 = vpop.permute.xlu0 %965
    %967 = vrot.lane.b32.xlu0 %v961, 96
    %v968 = vpop.permute.xlu0 %967
    %971 = vst.msk [vmem:[#allocation2 + $0x10] sm:$0xff] %vm835, %v966
    %972 = vst.msk [vmem:[#allocation2 + $0x18] sm:$0xff] %vm835, %v968
    %v973 = vld [vmem:[#allocation2] sm:$0xff]
    %v974 = vld [vmem:[#allocation2 + $0x8] sm:$0xff]
    %v975 = vld [vmem:[#allocation2 + $0x10] sm:$0xff]
    %v976 = vld [vmem:[#allocation2 + $0x18] sm:$0xff]
    %v977 = vpack.c.bf16 %v973, %v973
    %v978 = vpack.c.bf16 %v974, %v974
    %v979 = vpack.c.bf16 %v975, %v975
    %v980 = vpack.c.bf16 %v976, %v976
    %v981 = vld [vmem:[%s3] sm:$0xf]
    %v982 = vld [vmem:[%s3 + $0x4] sm:$0xf]
    %v983 = vld [vmem:[%s3 + $0x8] sm:$0xf]
    %v984 = vld [vmem:[%s3 + $0xc] sm:$0xf]
    %v985 = vld [vmem:[%s3 + $0x10] sm:$0xf]
    %v986 = vld [vmem:[%s3 + $0x14] sm:$0xf]
    %v987 = vld [vmem:[%s3 + $0x18] sm:$0xf]
    %v988 = vld [vmem:[%s3 + $0x1c] sm:$0xf]
    %v989 = vld [vmem:[%s3 + $0x20] sm:$0xf]
    %v990 = vld [vmem:[%s3 + $0x24] sm:$0xf]
    %v991 = vld [vmem:[%s3 + $0x28] sm:$0xf]
    %v992 = vld [vmem:[%s3 + $0x2c] sm:$0xf]
    %v993 = vld [vmem:[%s3 + $0x30] sm:$0xf]
    %v994 = vld [vmem:[%s3 + $0x34] sm:$0xf]
    %v995 = vld [vmem:[%s3 + $0x38] sm:$0xf]
    %v996 = vld [vmem:[%s3 + $0x3c] sm:$0xf]
    %v997 = vld [vmem:[%s4] sm:$0x1]
    %v999 = vperm.slane %v997, 0
    %v1005 = vunpack.c.l.b16 %v977
    %v1006 = vunpack.c.l.b16 %v978
    %v1007 = vunpack.c.l.b16 %v979
    %v1008 = vunpack.c.l.b16 %v980
    %v1009 = vpack.c.b16 %v1006, %v1005
    %v1010 = vpack.c.b16 %v1008, %v1007
    %v1029 = vunpack.c.l.b16 %v981
    %v1030 = vunpack.c.l.b16 %v982
    %v1031 = vunpack.c.l.b16 %v983
    %v1032 = vunpack.c.l.b16 %v984
    %v1033 = vunpack.c.l.b16 %v985
    %v1034 = vunpack.c.l.b16 %v986
    %v1035 = vunpack.c.l.b16 %v987
    %v1036 = vunpack.c.l.b16 %v988
    %v1037 = vunpack.c.l.b16 %v989
    %v1038 = vunpack.c.l.b16 %v990
    %v1039 = vunpack.c.l.b16 %v991
    %v1040 = vunpack.c.l.b16 %v992
    %v1041 = vunpack.c.l.b16 %v993
    %v1042 = vunpack.c.l.b16 %v994
    %v1043 = vunpack.c.l.b16 %v995
    %v1044 = vunpack.c.l.b16 %v996
    %v1045 = vpack.c.b16 %v1030, %v1029
    %v1046 = vpack.c.b16 %v1032, %v1031
    %v1047 = vpack.c.b16 %v1034, %v1033
    %v1048 = vpack.c.b16 %v1036, %v1035
    %v1049 = vpack.c.b16 %v1038, %v1037
    %v1050 = vpack.c.b16 %v1040, %v1039
    %v1051 = vpack.c.b16 %v1042, %v1041
    %v1052 = vpack.c.b16 %v1044, %v1043
    %1061 = vmatpush.bf16.msra.mxu0 %v1052
    %1062 = vmatpush.bf16.msra.mxu0 %v1051
    %1063 = vmatpush.bf16.msra.mxu0 %v1050
    %1064 = vmatpush.bf16.msra.mxu0 %v1049
    %1065 = vmatpush.bf16.msra.mxu0 %v1048
    %1066 = vmatpush.bf16.msra.mxu0 %v1047
    %1067 = vmatpush.bf16.msra.mxu0 %v1046
    %1068 = vmatpush.bf16.msra.mxu0 %v1045
    %1069 = vmatmul.bf16.gmra.mxu0 %v1009
    %v1070 = vpop.f32.mrf.mxu0
    %v1071 = vadd.f32 %v999, %v1070
    %v1072 = vpop.f32.mrf.mxu0
    %v1073 = vadd.f32 %v999, %v1072
    %1074 = vmatmul.bf16.gmra.mxu0 %v1010
    %v1075 = vpop.f32.mrf.mxu0
    %v1076 = vadd.f32 %v999, %v1075
    %v1077 = vpop.f32.mrf.mxu0
    %v1078 = vadd.f32 %v999, %v1077
    %1079 = vdwg.mxu0
    %v1080 = vtanh.pop %v1071
    %v1081 = vtanh.pop %v1073
    %v1082 = vtanh.pop %v1076
    %v1083 = vtanh.pop %v1078
    %v1084 = vld [vmem:[%s5] sm:$0x1]
    %v1085 = vpack.c.bf16 %v1081, %v1080
    %v1086 = vpack.c.bf16 %v1083, %v1082
    %v1088 = vsel %vm298, %v1084, 0
    %v1091 = vsel %vm298, %v1085, 0
    %v1094 = vsel %vm298, %v1086, 0
    %1096 = vmatpush.bf16.xpose.msra.mxu0 0
    %1097 = vmatpush.bf16.xpose.msra.mxu0 0
    %1098 = vmatpush.bf16.xpose.msra.mxu0 0
    %1099 = vmatpush.bf16.xpose.msra.mxu0 0
    %1100 = vmatpush.bf16.xpose.msra.mxu0 0
    %1101 = vmatpush.bf16.xpose.msra.mxu0 0
    %1102 = vmatpush.bf16.xpose.msra.mxu0 %v1094
    %1103 = vmatpush.bf16.xpose.msra.mxu0 %v1091
    %1104 = vmatmul.bf16.gmra.mxu0 %v1088
    %v1105 = vpop.f32.mrf.mxu0
    %v1106 = vadd.f32 0.0, %v1105
    %v1107 = vpop.f32.mrf.mxu0
    %1108 = vdwg.mxu0
    %vm1109 = vcmask 122880
    %v1110 = vsel %vm1109, %v1106, -inf
    %1111 = vmax.xlane.f32.xlu0 %v1110
    %v1112 = vpop.xlane.xlu0 %1111
    %v1113 = vsub.f32 %v1106, %v1112
    %v1114 = vmul.f32 %v1113, 1.442695
    %v1115 = vpow.pop %v1114
    %v1116 = vsel %vm1109, %v1115, 0.0
    %1117 = vadd.xlane.f32.xlu0 %v1116
    %v1118 = vpop.xlane.xlu0 %1117
    %v1119 = vrcp.pop %v1118
    %v1120 = vmul.f32 %v1115, %v1119
    %v1121 = vpack.c.bf16 %v1120, %v1120
    %v1123 = vsel %vm507, %v1121, 0
    %1125 = vmatpush.bf16.msra.mxu0 0
    %1126 = vmatpush.bf16.msra.mxu0 0
    %1127 = vmatpush.bf16.msra.mxu0 0
    %1128 = vmatpush.bf16.msra.mxu0 0
    %1129 = vmatpush.bf16.msra.mxu0 0
    %1130 = vmatpush.bf16.msra.mxu0 0
    %1131 = vmatpush.bf16.msra.mxu0 0
    %1132 = vmatpush.bf16.msra.mxu0 %v1009
    %1133 = vmatmul.bf16.gmra.mxu0 %v1123
    %v1134 = vpop.f32.mrf.mxu0
    %v1135 = vadd.f32 0.0, %v1134
    %v1136 = vpop.f32.mrf.mxu0
    %1137 = vdwg.mxu0
    %1138 = vst [vmem:[#allocation6] sm:$0x1] %v1135
    %vm1139 = vcmask 254080
    %v1140 = vsel %vm1139, %v1106, -inf
    %1141 = vmax.xlane.f32.xlu0 %v1140
    %v1142 = vpop.xlane.xlu0 %1141
    %v1143 = vsub.f32 %v1106, %v1142
    %v1144 = vmul.f32 %v1143, 1.442695
    %v1145 = vpow.pop %v1144
    %1147 = vrot.lane.b32.xlu0 %v1145, 112
    %v1148 = vpop.permute.xlu0 %1147
    %v1150 = vsel %vm1109, %v1148, 0.0
    %1151 = vadd.xlane.f32.xlu0 %v1150
    %v1152 = vpop.xlane.xlu0 %1151
    %v1153 = vrcp.pop %v1152
    %v1154 = vmul.f32 %v1145, %v1153
    %v1155 = vpack.c.bf16 %v1154, %v1154
    %1157 = vrot.lane.b32.xlu0 %v1155, 112
    %v1158 = vpop.permute.xlu0 %1157
    %v1160 = vsel %vm507, %v1158, 0
    %1162 = vmatpush.bf16.msra.mxu0 0
    %1163 = vmatpush.bf16.msra.mxu0 0
    %1164 = vmatpush.bf16.msra.mxu0 0
    %1165 = vmatpush.bf16.msra.mxu0 0
    %1166 = vmatpush.bf16.msra.mxu0 0
    %1167 = vmatpush.bf16.msra.mxu0 0
    %1168 = vmatpush.bf16.msra.mxu0 0
    %1169 = vmatpush.bf16.msra.mxu0 %v1010
    %1170 = vmatmul.bf16.gmra.mxu0 %v1160
    %v1171 = vpop.f32.mrf.mxu0
    %v1172 = vadd.f32 0.0, %v1171
    %v1173 = vpop.f32.mrf.mxu0
    %1174 = vdwg.mxu0
    %1175 = vst [vmem:[#allocation6 + $0x1] sm:$0x1] %v1172
    // Predicated region
    $region30: #{tpu_custom_call.1} parent=1 // pred_check
      _
    $region31: #{tpu_custom_call.1} parent=1 // pred_check_branch
      %1177 = sbr.rel (0) target = $region33
    $region32: #{tpu_custom_call.1} parent=1 // pred_region
      %1179 = vsyncadd [#allocation5], 0
      %s1181 = sshll.u32 [#allocation6], 4
      %s1182 = int_to_ptr.vmem [resolvable:$true] %s1181
      %s1183 = sshll.u32 %s6, 4
      %s1184 = int_to_ptr.hbm [resolvable:$true] %s1183
      %1186 = dma.vmem_to_hbm [thread:$0]  %s1182, 32, %s1184, [#allocation5]
    $region33: #{tpu_custom_call.1} parent=1 // pred_fallthru
      _
    // Predicated region
    $region34: #{tpu_custom_call.1} parent=1 // pred_check
      _
    $region35: #{tpu_custom_call.1} parent=1 // pred_check_branch
      %1188 = sbr.rel (0) target = $region37
    $region36: #{tpu_custom_call.1} parent=1 // pred_region
      %1190 = dma.done [#allocation5], 32
    $region37: #{tpu_custom_call.1} parent=1 // pred_fallthru
      _
    %1191 = vsyncpa [#allocation4], 1
    %1192 = vsyncpa [#allocation5], 1

</llo_original>
